<compile_context>
chip_gen: v6e
topology: v6e:2x2x1
jax: 0.10.0
libtpu: 0.0.40
codegen_flags: <defaults>
</compile_context>

<pallas_src>
import math

import jax
import jax.numpy as jnp
from jax import lax
from jax.experimental import pallas as pl
from jax.experimental.pallas import tpu as pltpu

INIT_SIGMA = 0.5
FACTORIZED = True


def _noisy_linear_kernel(x_ref, w_ref, nw_ref, b_ref, nb_ref,
                         eps_in_ref, eps_out_ref, o_ref,
                         acc_ref, nacc_ref):
    """Grid = (M tiles, N tiles, K tiles); K (in_features) is the reduction axis."""
    k = pl.program_id(2)

    @pl.when(k == 0)
    def _():
        acc_ref[...] = jnp.zeros_like(acc_ref)
        nacc_ref[...] = jnp.zeros_like(nacc_ref)

    x = x_ref[...]                                  # (TM, TK)
    xn = x * eps_in_ref[...]                        # (TM, TK) * (1, TK)

    dn = (((1,), (1,)), ((), ()))                   # contract in_features: x @ W^T
    acc_ref[...] += lax.dot_general(
        x, w_ref[...], dimension_numbers=dn, preferred_element_type=jnp.float32)
    nacc_ref[...] += lax.dot_general(
        xn, nw_ref[...], dimension_numbers=dn, preferred_element_type=jnp.float32)

    @pl.when(k == pl.num_programs(2) - 1)
    def _():
        eps_out = eps_out_ref[...]                          # (1, TN) f32
        b_eff = b_ref[...] + nb_ref[...] * eps_out          # (1, TN) f32
        y = acc_ref[...] + nacc_ref[...] * eps_out + b_eff  # (TM, TN) f32
        o_ref[...] = y.astype(o_ref.dtype)


def _pick_tile(dim, target, quantum):
    """Largest multiple-of-`quantum` divisor of `dim` that is <= target (or full dim)."""
    if dim <= target or dim % quantum != 0:
        return dim
    t = (min(target, dim) // quantum) * quantum
    while dim % t != 0:
        t -= quantum
    return t


def noisy_linear_forward(x, weight, noisy_weight, bias, noisy_bias,
                         eps_in, eps_out, *,
                         tm_target=256, tn_target=256, tk_target=512):
    """x: (B, in); weight/noisy_weight: (out, in); bias/noisy_bias: (out,);
    eps_in: (in,) already f-transformed; eps_out: (out,) already f-transformed.

    Weights may be f32 or bf16; accumulation is always f32 on the MXU.
    """
    B, in_f = x.shape
    out_f, in_f2 = weight.shape
    assert in_f == in_f2, "weight shape must be (out_features, in_features)"
    out_dtype = x.dtype

    # Pad batch up to the sublane quantum (8); sliced off after the call.
    pad_b = (-B) % 8
    if pad_b:
        x = jnp.pad(x, ((0, pad_b), (0, 0)))
    Bp = B + pad_b

    tm = _pick_tile(Bp, tm_target, 8)
    tn = _pick_tile(out_f, tn_target, 128)   # lane-dense output tile when possible
    tk = _pick_tile(in_f, tk_target, 128)
    grid = (Bp // tm, out_f // tn, in_f // tk)

    eps_in_row = eps_in.reshape(1, in_f).astype(x.dtype)
    eps_out_row = eps_out.reshape(1, out_f).astype(jnp.float32)
    bias_row = bias.reshape(1, out_f).astype(jnp.float32)
    noisy_bias_row = noisy_bias.reshape(1, out_f).astype(jnp.float32)

    return_full = pl.pallas_call(
        _noisy_linear_kernel,
        out_shape=jax.ShapeDtypeStruct((Bp, out_f), out_dtype),
        grid_spec=pltpu.PrefetchScalarGridSpec(
            num_scalar_prefetch=0,
            grid=grid,
            in_specs=[
                pl.BlockSpec((tm, tk), lambda i, j, k: (i, k)),   # x
                pl.BlockSpec((tn, tk), lambda i, j, k: (j, k)),   # weight
                pl.BlockSpec((tn, tk), lambda i, j, k: (j, k)),   # sigma_W
                pl.BlockSpec((1, tn), lambda i, j, k: (0, j)),    # bias
                pl.BlockSpec((1, tn), lambda i, j, k: (0, j)),    # sigma_b
                pl.BlockSpec((1, tk), lambda i, j, k: (0, k)),    # eps_in row
                pl.BlockSpec((1, tn), lambda i, j, k: (0, j)),    # eps_out row
            ],
            out_specs=pl.BlockSpec((tm, tn), lambda i, j, k: (i, j)),
            scratch_shapes=[pltpu.VMEM((tm, tn), jnp.float32),
                            pltpu.VMEM((tm, tn), jnp.float32)],
        ),
        compiler_params=pltpu.CompilerParams(
            dimension_semantics=("parallel", "parallel", "arbitrary")),
    )(x, weight, noisy_weight, bias_row, noisy_bias_row, eps_in_row, eps_out_row)

    if pad_b:
        return_full = return_full[:B]
    return return_full


def _f_transform(eps):
    # sign(x) * sqrt(|x|)
    return jnp.sign(eps) * jnp.sqrt(jnp.abs(eps))


def init_params(key, in_features, out_features,
                initial_sigma=INIT_SIGMA, factorized=FACTORIZED):
    """Deterministic re-implementation of NoisyLinear.reset_parameters."""
    kw, kb = jax.random.split(key)
    if factorized:
        sqrt_in = math.sqrt(in_features)
        bound = 1.0 / sqrt_in
        sigma_init = initial_sigma / sqrt_in
    else:
        bound = math.sqrt(3.0 / in_features)
        sigma_init = initial_sigma
    weight = jax.random.uniform(kw, (out_features, in_features),
                                minval=-bound, maxval=bound, dtype=jnp.float32)
    noisy_weight = jnp.full((out_features, in_features), sigma_init, jnp.float32)
    bias = jax.random.uniform(kb, (out_features,),
                              minval=-bound, maxval=bound, dtype=jnp.float32)
    noisy_bias = jnp.full((out_features,), sigma_init, jnp.float32)
    return weight, noisy_weight, bias, noisy_bias


if __name__ == "__main__":
    in_features, out_features, batch = 512, 256, 8

    key = jax.random.PRNGKey(0)
    k_param, k_x, k_eps_in, k_eps_out = jax.random.split(key, 4)

    weight, noisy_weight, bias, noisy_bias = init_params(
        k_param, in_features, out_features)

    x = jax.random.normal(k_x, (batch, in_features), dtype=jnp.float32)

    # Factorized Gaussian noise (deterministic via PRNGKey), f-transformed.
    # TODO(synk): torch.randn sampling is replicated with jax.random outside the kernel.
    eps_in = _f_transform(
        jax.random.normal(k_eps_in, (in_features,), dtype=jnp.float32))
    eps_out = _f_transform(
        jax.random.normal(k_eps_out, (out_features,), dtype=jnp.float32))

    # Small tile targets so the demo shapes exercise a real (1, 2, 2) grid
    # with K-reduction accumulation across grid steps.
    y = noisy_linear_forward(x, weight, noisy_weight, bias, noisy_bias,
                             eps_in, eps_out,
                             tm_target=256, tn_target=128, tk_target=256)
    y = jax.block_until_ready(y)

    # Pure-JAX reference for correctness (explicit W_eff construction).
    w_eff = weight + noisy_weight * (eps_out[:, None] * eps_in[None, :])
    b_eff = bias + noisy_bias * eps_out
    y_ref = x @ w_eff.T + b_eff

    assert y.shape == (batch, out_features)
    assert jnp.allclose(y, y_ref, atol=1e-4, rtol=1e-4), "mismatch vs reference"

    print("KERNEL_OK")
</pallas_src>

<mosaic_0001>
module attributes {stable_mosaic.version = 11 : i64} {
  func.func @_noisy_linear_kernel(%arg0: i32, %arg1: i32, %arg2: i32, %arg3: memref<8x256xf32, #tpu.memory_space<vmem>>, %arg4: memref<128x256xf32, #tpu.memory_space<vmem>>, %arg5: memref<128x256xf32, #tpu.memory_space<vmem>>, %arg6: memref<1x128xf32, #tpu.memory_space<vmem>>, %arg7: memref<1x128xf32, #tpu.memory_space<vmem>>, %arg8: memref<1x256xf32, #tpu.memory_space<vmem>>, %arg9: memref<1x128xf32, #tpu.memory_space<vmem>>, %arg10: memref<8x128xf32, #tpu.memory_space<vmem>>, %arg11: memref<8x128xf32, #tpu.memory_space<vmem>>, %arg12: memref<8x128xf32, #tpu.memory_space<vmem>>) attributes {dimension_semantics = [#tpu.dimension_semantics<parallel>, #tpu.dimension_semantics<parallel>, #tpu.dimension_semantics<arbitrary>], iteration_bounds = array<i64: 1, 2, 2>, scalar_prefetch = 0 : i64, scratch_operands = 2 : i64, tpu.core_type = #tpu.core_type<tc>, window_params = [{transform_indices = @transform_0, window_bounds = array<i64: 8, 256>}, {transform_indices = @transform_1, window_bounds = array<i64: 128, 256>}, {transform_indices = @transform_2, window_bounds = array<i64: 128, 256>}, {transform_indices = @transform_3, window_bounds = array<i64: 1, 128>}, {transform_indices = @transform_4, window_bounds = array<i64: 1, 128>}, {transform_indices = @transform_5, window_bounds = array<i64: 1, 256>}, {transform_indices = @transform_6, window_bounds = array<i64: 1, 128>}, {transform_indices = @transform_7, window_bounds = array<i64: 8, 128>}]} {
    %c0_i32 = arith.constant 0 : i32
    %0 = arith.cmpi eq, %arg2, %c0_i32 : i32
    %1 = arith.extui %0 : i1 to i32
    %c0_i32_0 = arith.constant 0 : i32
    %2 = arith.cmpi ne, %1, %c0_i32_0 : i32
    scf.if %2 {
      %cst_18 = arith.constant 0.000000e+00 : f32
      %20 = vector.broadcast %cst_18 : f32 to vector<8x128xf32>
      %c0_19 = arith.constant 0 : index
      %c0_20 = arith.constant 0 : index
      %21 = vector.load %arg11[%c0_19, %c0_20] : memref<8x128xf32, #tpu.memory_space<vmem>>, vector<8x128xf32>
      tpu.vector_store %arg11[%c0_19, %c0_20], %20 {strides = array<i32>} : memref<8x128xf32, #tpu.memory_space<vmem>>, vector<8x128xf32>,
      %cst_21 = arith.constant 0.000000e+00 : f32
      %22 = vector.broadcast %cst_21 : f32 to vector<8x128xf32>
      %c0_22 = arith.constant 0 : index
      %c0_23 = arith.constant 0 : index
      %23 = vector.load %arg12[%c0_22, %c0_23] : memref<8x128xf32, #tpu.memory_space<vmem>>, vector<8x128xf32>
      tpu.vector_store %arg12[%c0_22, %c0_23], %22 {strides = array<i32>} : memref<8x128xf32, #tpu.memory_space<vmem>>, vector<8x128xf32>,
    } else {
    }
    %c0 = arith.constant 0 : index
    %c0_1 = arith.constant 0 : index
    %3 = vector.load %arg3[%c0, %c0_1] : memref<8x256xf32, #tpu.memory_space<vmem>>, vector<8x256xf32>
    %c0_2 = arith.constant 0 : index
    %c0_3 = arith.constant 0 : index
    %4 = vector.load %arg8[%c0_2, %c0_3] : memref<1x256xf32, #tpu.memory_space<vmem>>, vector<1x256xf32>
    %5 = vector.broadcast %4 : vector<1x256xf32> to vector<8x256xf32>
    %6 = arith.mulf %3, %5 : vector<8x256xf32>
    %c0_4 = arith.constant 0 : index
    %c0_5 = arith.constant 0 : index
    %7 = vector.load %arg11[%c0_4, %c0_5] : memref<8x128xf32, #tpu.memory_space<vmem>>, vector<8x128xf32>
    %c0_6 = arith.constant 0 : index
    %c0_7 = arith.constant 0 : index
    %8 = vector.load %arg4[%c0_6, %c0_7] : memref<128x256xf32, #tpu.memory_space<vmem>>, vector<128x256xf32>
    %cst = arith.constant dense<0.000000e+00> : vector<8x128xf32>
    %9 = tpu.matmul %3, %8, %cst {dimension_numbers = #tpu.dot_dimension_numbers<[1], [1], [0], [0], [0, 0, 1, 0], [], []>} : vector<8x256xf32>, vector<128x256xf32>, vector<8x128xf32> -> vector<8x128xf32>
    %10 = arith.addf %7, %9 : vector<8x128xf32>
    %c0_8 = arith.constant 0 : index
    %c0_9 = arith.constant 0 : index
    %11 = vector.load %arg11[%c0_8, %c0_9] : memref<8x128xf32, #tpu.memory_space<vmem>>, vector<8x128xf32>
    tpu.vector_store %arg11[%c0_8, %c0_9], %10 {strides = array<i32>} : memref<8x128xf32, #tpu.memory_space<vmem>>, vector<8x128xf32>,
    %c0_10 = arith.constant 0 : index
    %c0_11 = arith.constant 0 : index
    %12 = vector.load %arg12[%c0_10, %c0_11] : memref<8x128xf32, #tpu.memory_space<vmem>>, vector<8x128xf32>
    %c0_12 = arith.constant 0 : index
    %c0_13 = arith.constant 0 : index
    %13 = vector.load %arg5[%c0_12, %c0_13] : memref<128x256xf32, #tpu.memory_space<vmem>>, vector<128x256xf32>
    %cst_14 = arith.constant dense<0.000000e+00> : vector<8x128xf32>
    %14 = tpu.matmul %6, %13, %cst_14 {dimension_numbers = #tpu.dot_dimension_numbers<[1], [1], [0], [0], [0, 0, 1, 0], [], []>} : vector<8x256xf32>, vector<128x256xf32>, vector<8x128xf32> -> vector<8x128xf32>
    %15 = arith.addf %12, %14 : vector<8x128xf32>
    %c0_15 = arith.constant 0 : index
    %c0_16 = arith.constant 0 : index
    %16 = vector.load %arg12[%c0_15, %c0_16] : memref<8x128xf32, #tpu.memory_space<vmem>>, vector<8x128xf32>
    tpu.vector_store %arg12[%c0_15, %c0_16], %15 {strides = array<i32>} : memref<8x128xf32, #tpu.memory_space<vmem>>, vector<8x128xf32>,
    %c1_i32 = arith.constant 1 : i32
    %17 = arith.cmpi eq, %arg2, %c1_i32 : i32
    %18 = arith.extui %17 : i1 to i32
    %c0_i32_17 = arith.constant 0 : i32
    %19 = arith.cmpi ne, %18, %c0_i32_17 : i32
    scf.if %19 {
      %c0_18 = arith.constant 0 : index
      %c0_19 = arith.constant 0 : index
      %20 = vector.load %arg9[%c0_18, %c0_19] : memref<1x128xf32, #tpu.memory_space<vmem>>, vector<1x128xf32>
      %c0_20 = arith.constant 0 : index
      %c0_21 = arith.constant 0 : index
      %21 = vector.load %arg6[%c0_20, %c0_21] : memref<1x128xf32, #tpu.memory_space<vmem>>, vector<1x128xf32>
      %c0_22 = arith.constant 0 : index
      %c0_23 = arith.constant 0 : index
      %22 = vector.load %arg7[%c0_22, %c0_23] : memref<1x128xf32, #tpu.memory_space<vmem>>, vector<1x128xf32>
      %23 = arith.mulf %22, %20 : vector<1x128xf32>
      %24 = arith.addf %21, %23 : vector<1x128xf32>
      %c0_24 = arith.constant 0 : index
      %c0_25 = arith.constant 0 : index
      %25 = vector.load %arg11[%c0_24, %c0_25] : memref<8x128xf32, #tpu.memory_space<vmem>>, vector<8x128xf32>
      %c0_26 = arith.constant 0 : index
      %c0_27 = arith.constant 0 : index
      %26 = vector.load %arg12[%c0_26, %c0_27] : memref<8x128xf32, #tpu.memory_space<vmem>>, vector<8x128xf32>
      %27 = vector.broadcast %20 : vector<1x128xf32> to vector<8x128xf32>
      %28 = arith.mulf %26, %27 : vector<8x128xf32>
      %29 = arith.addf %25, %28 : vector<8x128xf32>
      %30 = vector.broadcast %24 : vector<1x128xf32> to vector<8x128xf32>
      %31 = arith.addf %29, %30 : vector<8x128xf32>
      %c0_28 = arith.constant 0 : index
      %c0_29 = arith.constant 0 : index
      %32 = vector.load %arg10[%c0_28, %c0_29] : memref<8x128xf32, #tpu.memory_space<vmem>>, vector<8x128xf32>
      tpu.vector_store %arg10[%c0_28, %c0_29], %31 {strides = array<i32>} : memref<8x128xf32, #tpu.memory_space<vmem>>, vector<8x128xf32>,
    } else {
    }
    return
  }
  func.func @transform_0(%arg0: i32, %arg1: i32, %arg2: i32) -> (i32, i32) {
    %c0_i32 = arith.constant 0 : i32
    return %arg0, %arg2 : i32, i32
  }
  func.func @transform_1(%arg0: i32, %arg1: i32, %arg2: i32) -> (i32, i32) {
    %c0_i32 = arith.constant 0 : i32
    return %arg1, %arg2 : i32, i32
  }
  func.func @transform_2(%arg0: i32, %arg1: i32, %arg2: i32) -> (i32, i32) {
    %c0_i32 = arith.constant 0 : i32
    return %arg1, %arg2 : i32, i32
  }
  func.func @transform_3(%arg0: i32, %arg1: i32, %arg2: i32) -> (i32, i32) {
    %c0_i32 = arith.constant 0 : i32
    %c0_i32_0 = arith.constant 0 : i32
    return %c0_i32, %arg1 : i32, i32
  }
  func.func @transform_4(%arg0: i32, %arg1: i32, %arg2: i32) -> (i32, i32) {
    %c0_i32 = arith.constant 0 : i32
    %c0_i32_0 = arith.constant 0 : i32
    return %c0_i32, %arg1 : i32, i32
  }
  func.func @transform_5(%arg0: i32, %arg1: i32, %arg2: i32) -> (i32, i32) {
    %c0_i32 = arith.constant 0 : i32
    %c0_i32_0 = arith.constant 0 : i32
    return %c0_i32, %arg2 : i32, i32
  }
  func.func @transform_6(%arg0: i32, %arg1: i32, %arg2: i32) -> (i32, i32) {
    %c0_i32 = arith.constant 0 : i32
    %c0_i32_0 = arith.constant 0 : i32
    return %c0_i32, %arg1 : i32, i32
  }
  func.func @transform_7(%arg0: i32, %arg1: i32, %arg2: i32) -> (i32, i32) {
    %c0_i32 = arith.constant 0 : i32
    return %arg0, %arg1 : i32, i32
  }
}

</mosaic_0001>

<llo_original>
// kernel: tpu_custom_call.1
$region0: #{tpu_custom_call.1}
  #allocation0 [shape = 'u32[]', space=smem, size = 0x4, offset = 0x4, fixed_abs, tag = 'smem constant byte address 0x4 - core index']
  #allocation1 [shape = 'u32[144,128]{1,0:T(1,128)}', space=vmem, size = 0x12000, scoped, tag = 'internal scratch']
  #allocation2 [shape = 'f32[8,128]{1,0:T(8,128)}', space=vmem, size = 0x1000, scoped, tag = 'scratch operand']
  #allocation3 [shape = 'f32[8,128]{1,0:T(8,128)}', space=vmem, size = 0x1000, scoped, tag = 'scratch operand']
  %s0 = inlined_call_operand.hbm [shape: f32[8,512], index: 0, kind: input, shape index: {}]
  %s1 = inlined_call_operand.hbm [shape: f32[256,512], index: 1, kind: input, shape index: {}]
  %s2 = inlined_call_operand.hbm [shape: f32[256,512], index: 2, kind: input, shape index: {}]
  %s3 = inlined_call_operand.vmem [shape: f32[1,256], index: 3, kind: input, shape index: {}]
  %s4 = inlined_call_operand.hbm [shape: f32[1,256], index: 4, kind: input, shape index: {}]
  %s5 = inlined_call_operand.vmem [shape: f32[1,512], index: 5, kind: input, shape index: {}]
  %s6 = inlined_call_operand.vmem [shape: f32[1,256], index: 6, kind: input, shape index: {}]
  %s7 = inlined_call_operand.hbm [shape: f32[8,256], index: 7, kind: output, shape index: {}]
  %s8 = sld [smem:[#allocation0]]
  $region85: #{tpu_custom_call.1} parent=0
    _
  %s10 = ssub.s32 1, %s8
  %s11 = scalar_select 0, %s10, %s8
  $region1: #{tpu_custom_call.1} parent=0
    #allocation4 [shape = 'u8[16384]{0}', space=vmem, size = 0x4000, scoped, tag = 'input window, operand 0']
    #allocation5 [shape = 's32[2]{0}', space=sflag, size = 0x8, scoped, tag = 'scoped memory for tpu_custom_call.1']
    #allocation6 [shape = 's32[2]{0}', space=sflag, size = 0x8, scoped, tag = 'scoped memory for tpu_custom_call.1']
    #allocation7 [shape = 'u8[262144]{0}', space=vmem, size = 0x40000, scoped, tag = 'input window, operand 1']
    #allocation8 [shape = 's32[2]{0}', space=sflag, size = 0x8, scoped, tag = 'scoped memory for tpu_custom_call.1']
    #allocation9 [shape = 'u8[262144]{0}', space=vmem, size = 0x40000, scoped, tag = 'input window, operand 2']
    #allocation10 [shape = 'u8[1024]{0}', space=vmem, size = 0x400, scoped, tag = 'input window, operand 4']
    #allocation11 [shape = 's32[2]{0}', space=sflag, size = 0x8, scoped, tag = 'scoped memory for tpu_custom_call.1']
    #allocation12 [shape = 'u8[8192]{0}', space=vmem, size = 0x2000, scoped, tag = 'output window, operand 0']
    %12 = vsyncpa [#allocation5], 0
    %s13 = scalar_lea.sflag [#allocation5], 1
    %14 = vsyncpa %s13, 0
    %15 = vsyncpa [#allocation8], 0
    %s16 = scalar_lea.sflag [#allocation8], 1
    %17 = vsyncpa %s16, 0
    %18 = vsyncpa [#allocation11], 0
    %s19 = scalar_lea.sflag [#allocation11], 1
    %20 = vsyncpa %s19, 0
    %21 = vsyncpa [#allocation6], 0
    %s22 = scalar_lea.sflag [#allocation6], 1
    %23 = vsyncpa %s22, 0
    loop: start=0, step=1, limit=6
    $region2: #{tpu_custom_call.1} parent=1 // loop_pre_header
      _
    $region3: #{tpu_custom_call.1} parent=1 // loop_header
      %s25 = sphi 0, %s29
      %p26 = scmp.ge.s32.totalorder %s25, 6
      %s32 = sphi 0, %s51
      %s33 = sphi 0, %s47
      %s34 = sphi 0, %s43
      %s35 = sphi 0, %s32
      %s36 = sphi 0, %s33
      %s37 = sphi 0, %s34
      %s38 = sphi 0, %s35
      %s39 = sphi 0, %s36
      %s40 = sphi 0, %s37
      %s56 = sphi 0, %s58
      %s59 = sphi 0, %s56
      %s60 = sphi 0, %s59
      %s76 = sphi 0, %s60
      %s84 = sphi 0, %s86
      %s87 = sphi 0, %s84
      %s88 = sphi 0, %s87
      %s104 = sphi 0, %s88
      %s112 = sphi 0, %s114
      %s115 = sphi 0, %s112
      %s116 = sphi 0, %s115
      %s132 = sphi 0, %s116
      %s138 = sphi 0, %s140
      %s141 = sphi 0, %s138
      %s142 = sphi 0, %s141
      %s158 = sphi 0, %s142
      %s164 = sphi 0, %s166
      %s167 = sphi 0, %s164
      %s168 = sphi 0, %s167
      %s184 = sphi 0, %s168
      %s190 = sphi 0, %s192
      %s193 = sphi 0, %s190
      %s194 = sphi 0, %s193
      %s210 = sphi 0, %s194
      %s216 = sphi 0, %s218
      %s219 = sphi 0, %s216
      %s220 = sphi 0, %s219
      %s236 = sphi 0, %s220
      %s244 = sphi 0, %s246
      %s247 = sphi 0, %s244
      %s248 = sphi 0, %s247
      %s264 = sphi 0, %s248
    $region4: #{tpu_custom_call.1} parent=1 // loop_header_branch
      %28 = sbr.rel (%p26) target = $region8
    $region5: #{tpu_custom_call.1} parent=1 // loop_body
      %s30 = ssub.s32 %s25, 1
      %s31 = ssub.s32 %s25, 2
      %s41 = sadd.s32 1, %s34
      %p42 = scmp.ge.s32.totalorder %s41, 2
      %s43 = scalar_select %p42, 0, %s41
      %s44 = sadd.s32 1, %s33
      %s45 = scalar_select %p42, %s44, %s33
      %p46 = scmp.ge.s32.totalorder %s45, 2
      %s47 = scalar_select %p46, 0, %s45
      %s48 = sadd.s32 1, %s32
      %s49 = scalar_select %p46, %s48, %s32
      %p50 = scmp.ge.s32.totalorder %s49, 1
      %s51 = scalar_select %p50, 0, %s49
      %s52 = ssub.s32 %s32, %s51
      %s53 = ssub.s32 %s34, %s43
      %s54 = sor.u32 %s52, %s53
      %p55 = scmp.eq.s32.totalorder %s54, 0
      %s57 = sadd.s32 %s56, 1
      %s58 = scalar_select %p55, %s56, %s57
      %p61 = pneg %p55
      %p62 = scmp.eq.s32.totalorder %s25, 3
      %p63 = por %p61, %p62
      %p64 = scmp.ne.s32.totalorder %s56, %s59
      %p65 = scmp.eq.s32.totalorder %s25, 0
      %p66 = por %p64, %p65
      %p67 = scmp.ne.s32.totalorder %s56, %s59
      %p68 = scmp.eq.s32.totalorder %s30, 3
      %p69 = por %p67, %p68
      %p70 = scmp.ne.s32.totalorder %s59, %s60
      %p71 = scmp.eq.s32.totalorder %s30, 0
      %p72 = por %p70, %p71
      %p73 = scmp.ne.s32.totalorder %s59, %s60
      %p74 = scmp.eq.s32.totalorder %s31, 3
      %p75 = por %p73, %p74
      %p77 = scmp.ne.s32.totalorder %s60, %s76
      %p78 = scmp.eq.s32.totalorder %s31, 0
      %p79 = por %p77, %p78
      %s80 = ssub.s32 %s33, %s47
      %s81 = ssub.s32 %s34, %s43
      %s82 = sor.u32 %s80, %s81
      %p83 = scmp.eq.s32.totalorder %s82, 0
      %s85 = sadd.s32 %s84, 1
      %s86 = scalar_select %p83, %s84, %s85
      %p89 = pneg %p83
      %p90 = scmp.eq.s32.totalorder %s25, 3
      %p91 = por %p89, %p90
      %p92 = scmp.ne.s32.totalorder %s84, %s87
      %p93 = scmp.eq.s32.totalorder %s25, 0
      %p94 = por %p92, %p93
      %p95 = scmp.ne.s32.totalorder %s84, %s87
      %p96 = scmp.eq.s32.totalorder %s30, 3
      %p97 = por %p95, %p96
      %p98 = scmp.ne.s32.totalorder %s87, %s88
      %p99 = scmp.eq.s32.totalorder %s30, 0
      %p100 = por %p98, %p99
      %p101 = scmp.ne.s32.totalorder %s87, %s88
      %p102 = scmp.eq.s32.totalorder %s31, 3
      %p103 = por %p101, %p102
      %p105 = scmp.ne.s32.totalorder %s88, %s104
      %p106 = scmp.eq.s32.totalorder %s31, 0
      %p107 = por %p105, %p106
      %s108 = ssub.s32 %s33, %s47
      %s109 = ssub.s32 %s34, %s43
      %s110 = sor.u32 %s108, %s109
      %p111 = scmp.eq.s32.totalorder %s110, 0
      %s113 = sadd.s32 %s112, 1
      %s114 = scalar_select %p111, %s112, %s113
      %p117 = pneg %p111
      %p118 = scmp.eq.s32.totalorder %s25, 3
      %p119 = por %p117, %p118
      %p120 = scmp.ne.s32.totalorder %s112, %s115
      %p121 = scmp.eq.s32.totalorder %s25, 0
      %p122 = por %p120, %p121
      %p123 = scmp.ne.s32.totalorder %s112, %s115
      %p124 = scmp.eq.s32.totalorder %s30, 3
      %p125 = por %p123, %p124
      %p126 = scmp.ne.s32.totalorder %s115, %s116
      %p127 = scmp.eq.s32.totalorder %s30, 0
      %p128 = por %p126, %p127
      %p129 = scmp.ne.s32.totalorder %s115, %s116
      %p130 = scmp.eq.s32.totalorder %s31, 3
      %p131 = por %p129, %p130
      %p133 = scmp.ne.s32.totalorder %s116, %s132
      %p134 = scmp.eq.s32.totalorder %s31, 0
      %p135 = por %p133, %p134
      %s136 = ssub.s32 %s33, %s47
      %p137 = scmp.eq.s32.totalorder %s136, 0
      %s139 = sadd.s32 %s138, 1
      %s140 = scalar_select %p137, %s138, %s139
      %p143 = pneg %p137
      %p144 = scmp.eq.s32.totalorder %s25, 3
      %p145 = por %p143, %p144
      %p146 = scmp.ne.s32.totalorder %s138, %s141
      %p147 = scmp.eq.s32.totalorder %s25, 0
      %p148 = por %p146, %p147
      %p149 = scmp.ne.s32.totalorder %s138, %s141
      %p150 = scmp.eq.s32.totalorder %s30, 3
      %p151 = por %p149, %p150
      %p152 = scmp.ne.s32.totalorder %s141, %s142
      %p153 = scmp.eq.s32.totalorder %s30, 0
      %p154 = por %p152, %p153
      %p155 = scmp.ne.s32.totalorder %s141, %s142
      %p156 = scmp.eq.s32.totalorder %s31, 3
      %p157 = por %p155, %p156
      %p159 = scmp.ne.s32.totalorder %s142, %s158
      %p160 = scmp.eq.s32.totalorder %s31, 0
      %p161 = por %p159, %p160
      %s162 = ssub.s32 %s33, %s47
      %p163 = scmp.eq.s32.totalorder %s162, 0
      %s165 = sadd.s32 %s164, 1
      %s166 = scalar_select %p163, %s164, %s165
      %p169 = pneg %p163
      %p170 = scmp.eq.s32.totalorder %s25, 3
      %p171 = por %p169, %p170
      %p172 = scmp.ne.s32.totalorder %s164, %s167
      %p173 = scmp.eq.s32.totalorder %s25, 0
      %p174 = por %p172, %p173
      %p175 = scmp.ne.s32.totalorder %s164, %s167
      %p176 = scmp.eq.s32.totalorder %s30, 3
      %p177 = por %p175, %p176
      %p178 = scmp.ne.s32.totalorder %s167, %s168
      %p179 = scmp.eq.s32.totalorder %s30, 0
      %p180 = por %p178, %p179
      %p181 = scmp.ne.s32.totalorder %s167, %s168
      %p182 = scmp.eq.s32.totalorder %s31, 3
      %p183 = por %p181, %p182
      %p185 = scmp.ne.s32.totalorder %s168, %s184
      %p186 = scmp.eq.s32.totalorder %s31, 0
      %p187 = por %p185, %p186
      %s188 = ssub.s32 %s34, %s43
      %p189 = scmp.eq.s32.totalorder %s188, 0
      %s191 = sadd.s32 %s190, 1
      %s192 = scalar_select %p189, %s190, %s191
      %p195 = pneg %p189
      %p196 = scmp.eq.s32.totalorder %s25, 3
      %p197 = por %p195, %p196
      %p198 = scmp.ne.s32.totalorder %s190, %s193
      %p199 = scmp.eq.s32.totalorder %s25, 0
      %p200 = por %p198, %p199
      %p201 = scmp.ne.s32.totalorder %s190, %s193
      %p202 = scmp.eq.s32.totalorder %s30, 3
      %p203 = por %p201, %p202
      %p204 = scmp.ne.s32.totalorder %s193, %s194
      %p205 = scmp.eq.s32.totalorder %s30, 0
      %p206 = por %p204, %p205
      %p207 = scmp.ne.s32.totalorder %s193, %s194
      %p208 = scmp.eq.s32.totalorder %s31, 3
      %p209 = por %p207, %p208
      %p211 = scmp.ne.s32.totalorder %s194, %s210
      %p212 = scmp.eq.s32.totalorder %s31, 0
      %p213 = por %p211, %p212
      %s214 = ssub.s32 %s33, %s47
      %p215 = scmp.eq.s32.totalorder %s214, 0
      %s217 = sadd.s32 %s216, 1
      %s218 = scalar_select %p215, %s216, %s217
      %p221 = pneg %p215
      %p222 = scmp.eq.s32.totalorder %s25, 3
      %p223 = por %p221, %p222
      %p224 = scmp.ne.s32.totalorder %s216, %s219
      %p225 = scmp.eq.s32.totalorder %s25, 0
      %p226 = por %p224, %p225
      %p227 = scmp.ne.s32.totalorder %s216, %s219
      %p228 = scmp.eq.s32.totalorder %s30, 3
      %p229 = por %p227, %p228
      %p230 = scmp.ne.s32.totalorder %s219, %s220
      %p231 = scmp.eq.s32.totalorder %s30, 0
      %p232 = por %p230, %p231
      %p233 = scmp.ne.s32.totalorder %s219, %s220
      %p234 = scmp.eq.s32.totalorder %s31, 3
      %p235 = por %p233, %p234
      %p237 = scmp.ne.s32.totalorder %s220, %s236
      %p238 = scmp.eq.s32.totalorder %s31, 0
      %p239 = por %p237, %p238
      %s240 = ssub.s32 %s32, %s51
      %s241 = ssub.s32 %s33, %s47
      %s242 = sor.u32 %s240, %s241
      %p243 = scmp.eq.s32.totalorder %s242, 0
      %s245 = sadd.s32 %s244, 1
      %s246 = scalar_select %p243, %s244, %s245
      %p249 = pneg %p243
      %p250 = scmp.eq.s32.totalorder %s25, 3
      %p251 = por %p249, %p250
      %p252 = scmp.ne.s32.totalorder %s244, %s247
      %p253 = scmp.eq.s32.totalorder %s25, 0
      %p254 = por %p252, %p253
      %p255 = scmp.ne.s32.totalorder %s244, %s247
      %p256 = scmp.eq.s32.totalorder %s30, 3
      %p257 = por %p255, %p256
      %p258 = scmp.ne.s32.totalorder %s247, %s248
      %p259 = scmp.eq.s32.totalorder %s30, 0
      %p260 = por %p258, %p259
      %p261 = scmp.ne.s32.totalorder %s247, %s248
      %p262 = scmp.eq.s32.totalorder %s31, 3
      %p263 = por %p261, %p262
      %p265 = scmp.ne.s32.totalorder %s248, %s264
      %p266 = scmp.eq.s32.totalorder %s31, 0
      %p267 = por %p265, %p266
      %p268 = scmp.le.s32.totalorder 1, %s25
      %p269 = scmp.lt.s32.totalorder %s25, 5
      %p270 = pnand %p268, %p269
      %p271 = pneg %p270
      // Predicated region
      $region9: #{tpu_custom_call.1} parent=5 // pred_check
        _
      $region10: #{tpu_custom_call.1} parent=5 // pred_check_branch
        %273 = sbr.rel (%p270) target = $region12
      $region11: #{tpu_custom_call.1} parent=5 // pred_region
        %s274 = ssub.s32 %s25, 1
      $region12: #{tpu_custom_call.1} parent=5 // pred_fallthru
        _
      %p275 = scmp.lt.s32.totalorder %s25, 4
      // Predicated region
      $region13: #{tpu_custom_call.1} parent=5 // pred_check
        %p276 = pneg %p275
      $region14: #{tpu_custom_call.1} parent=5 // pred_check_branch
        %278 = sbr.rel (%p276) target = $region16
      $region15: #{tpu_custom_call.1} parent=5 // pred_region
        // Predicated region
        $region17: #{tpu_custom_call.1} parent=15 // pred_check
          %p279 = pneg %p66
        $region18: #{tpu_custom_call.1} parent=15 // pred_check_branch
          %281 = sbr.rel (%p279) target = $region20
        $region19: #{tpu_custom_call.1} parent=15 // pred_region
          %s282 = sand.u32 %s56, 1
          %s283 = scalar_lea.sflag [#allocation5], %s282
          %s284 = sand.u32 %s56, 1
          %s285 = smul.addr %s284, 16
          %s286 = scalar_lea.vmem [#allocation4], %s285
          %s287 = smul.u32 2, %s34
          %s289 = ssub.s32 256, 256
          %290 = vsyncadd %s283, %s289
          %s291 = smul.addr %s32, 4
          %s292 = sadd.s32 %s287, %s291
          %s293 = smul.addr %s292, 128
          %s294 = scalar_lea.hbm %s0, %s293
          %s296 = sshll.u32 %s286, 4
          %s297 = int_to_ptr.vmem [resolvable:$true] %s296
          %299 = dma.hbm_to_vmem [thread:$0]  %s294, 256, %s297, %s283
        $region20: #{tpu_custom_call.1} parent=15 // pred_fallthru
          _
        // Predicated region
        $region21: #{tpu_custom_call.1} parent=15 // pred_check
          %p300 = pneg %p94
        $region22: #{tpu_custom_call.1} parent=15 // pred_check_branch
          %302 = sbr.rel (%p300) target = $region24
        $region23: #{tpu_custom_call.1} parent=15 // pred_region
          %s303 = sand.u32 %s25, 1
          %s304 = scalar_lea.sflag [#allocation8], %s303
          %s305 = sand.u32 %s84, 1
          %s306 = smul.addr %s305, 256
          %s307 = scalar_lea.vmem [#allocation7], %s306
          %s308 = smul.u32 16, %s33
          %s309 = smul.u32 2, %s34
          %s311 = ssub.s32 4096, 4096
          %312 = vsyncadd %s304, %s311
          %s313 = smul.addr %s308, 4
          %s314 = sadd.s32 %s309, %s313
          %s315 = smul.addr %s314, 128
          %s316 = scalar_lea.hbm %s1, %s315
          %s317 = sshll.u32 %s307, 4
          %s318 = int_to_ptr.vmem [resolvable:$true] %s317
          %323 = dma.hbm_to_vmem [thread:$0]  %s316, 4096, %s318, %s304, 512, 256, 16
        $region24: #{tpu_custom_call.1} parent=15 // pred_fallthru
          _
        // Predicated region
        $region25: #{tpu_custom_call.1} parent=15 // pred_check
          %p324 = pneg %p122
        $region26: #{tpu_custom_call.1} parent=15 // pred_check_branch
          %326 = sbr.rel (%p324) target = $region28
        $region27: #{tpu_custom_call.1} parent=15 // pred_region
          %s327 = sand.u32 %s25, 1
          %s328 = scalar_lea.sflag [#allocation8], %s327
          %s329 = sand.u32 %s112, 1
          %s330 = smul.addr %s329, 256
          %s331 = scalar_lea.vmem [#allocation9], %s330
          %s332 = smul.u32 16, %s33
          %s333 = smul.u32 2, %s34
          %s335 = ssub.s32 4096, 4096
          %336 = vsyncadd %s328, %s335
          %s337 = smul.addr %s332, 4
          %s338 = sadd.s32 %s333, %s337
          %s339 = smul.addr %s338, 128
          %s340 = scalar_lea.hbm %s2, %s339
          %s341 = sshll.u32 %s331, 4
          %s342 = int_to_ptr.vmem [resolvable:$true] %s341
          %347 = dma.hbm_to_vmem [thread:$0]  %s340, 4096, %s342, %s328, 512, 256, 16
        $region28: #{tpu_custom_call.1} parent=15 // pred_fallthru
          _
        // Predicated region
        $region29: #{tpu_custom_call.1} parent=15 // pred_check
          %p348 = pneg %p148
        $region30: #{tpu_custom_call.1} parent=15 // pred_check_branch
          %350 = sbr.rel (%p348) target = $region32
        $region31: #{tpu_custom_call.1} parent=15 // pred_region
          %p351 = scmp.lt.s32.totalorder %s33, 1
          %s352 = scalar_select %p351, %s33, 1
          %s353 = scalar_lea.vmem %s3, %s352
        $region32: #{tpu_custom_call.1} parent=15 // pred_fallthru
          _
        // Predicated region
        $region33: #{tpu_custom_call.1} parent=15 // pred_check
          %p354 = pneg %p174
        $region34: #{tpu_custom_call.1} parent=15 // pred_check_branch
          %356 = sbr.rel (%p354) target = $region36
        $region35: #{tpu_custom_call.1} parent=15 // pred_region
          %s357 = sand.u32 %s164, 1
          %s358 = scalar_lea.sflag [#allocation11], %s357
          %s359 = sand.u32 %s164, 1
          %s360 = scalar_lea.vmem [#allocation10], %s359
          %s362 = ssub.s32 16, 16
          %363 = vsyncadd %s358, %s362
          %s364 = smul.addr %s33, 16
          %s365 = scalar_lea.hbm %s4, %s364
          %s367 = sshll.u32 %s360, 4
          %s368 = int_to_ptr.vmem [resolvable:$true] %s367
          %370 = dma.hbm_to_vmem [thread:$0]  %s365, 16, %s368, %s358
        $region36: #{tpu_custom_call.1} parent=15 // pred_fallthru
          _
        // Predicated region
        $region37: #{tpu_custom_call.1} parent=15 // pred_check
          %p371 = pneg %p200
        $region38: #{tpu_custom_call.1} parent=15 // pred_check_branch
          %373 = sbr.rel (%p371) target = $region40
        $region39: #{tpu_custom_call.1} parent=15 // pred_region
          %s374 = smul.u32 2, %s34
          %p375 = scmp.lt.s32.totalorder %s374, 3
          %s376 = scalar_select %p375, %s374, 3
          %s377 = scalar_lea.vmem %s5, %s376
          %s378 = smul.u32 2, %s34
        $region40: #{tpu_custom_call.1} parent=15 // pred_fallthru
          _
        // Predicated region
        $region41: #{tpu_custom_call.1} parent=15 // pred_check
          %p379 = pneg %p226
        $region42: #{tpu_custom_call.1} parent=15 // pred_check_branch
          %381 = sbr.rel (%p379) target = $region44
        $region43: #{tpu_custom_call.1} parent=15 // pred_region
          %p382 = scmp.lt.s32.totalorder %s33, 1
          %s383 = scalar_select %p382, %s33, 1
          %s384 = scalar_lea.vmem %s6, %s383
        $region44: #{tpu_custom_call.1} parent=15 // pred_fallthru
          _
      $region16: #{tpu_custom_call.1} parent=5 // pred_fallthru
        _
      %p385 = scmp.le.s32.totalorder 1, %s25
      %p386 = scmp.lt.s32.totalorder %s25, 5
      %p387 = pnand %p385, %p386
      %p388 = pneg %p387
      // Predicated region
      $region45: #{tpu_custom_call.1} parent=5 // pred_check
        _
      $region46: #{tpu_custom_call.1} parent=5 // pred_check_branch
        %390 = sbr.rel (%p387) target = $region48
      $region47: #{tpu_custom_call.1} parent=5 // pred_region
        %s391 = ssub.s32 %s25, 1
        %s392 = sand.u32 %s59, 1
        %s393 = scalar_lea.sflag [#allocation5], %s392
        %s394 = sand.u32 %s59, 1
        %s395 = smul.addr %s394, 16
        %s396 = scalar_lea.vmem [#allocation4], %s395
        // Predicated region
        $region49: #{tpu_custom_call.1} parent=47 // pred_check
          %p397 = pneg %p72
        $region50: #{tpu_custom_call.1} parent=47 // pred_check_branch
          %399 = sbr.rel (%p397) target = $region52
        $region51: #{tpu_custom_call.1} parent=47 // pred_region
          %400 = dma.done %s393, 256
        $region52: #{tpu_custom_call.1} parent=47 // pred_fallthru
          _
        %s401 = sand.u32 %s30, 1
        %s402 = scalar_lea.sflag [#allocation8], %s401
        %s403 = sand.u32 %s87, 1
        %s404 = smul.addr %s403, 256
        %s405 = scalar_lea.vmem [#allocation7], %s404
        // Predicated region
        $region53: #{tpu_custom_call.1} parent=47 // pred_check
          %p406 = pneg %p100
        $region54: #{tpu_custom_call.1} parent=47 // pred_check_branch
          %408 = sbr.rel (%p406) target = $region56
        $region55: #{tpu_custom_call.1} parent=47 // pred_region
          %409 = dma.done %s402, 4096
        $region56: #{tpu_custom_call.1} parent=47 // pred_fallthru
          _
        %s410 = sand.u32 %s30, 1
        %s411 = scalar_lea.sflag [#allocation8], %s410
        %s412 = sand.u32 %s115, 1
        %s413 = smul.addr %s412, 256
        %s414 = scalar_lea.vmem [#allocation9], %s413
        // Predicated region
        $region57: #{tpu_custom_call.1} parent=47 // pred_check
          %p415 = pneg %p128
        $region58: #{tpu_custom_call.1} parent=47 // pred_check_branch
          %417 = sbr.rel (%p415) target = $region60
        $region59: #{tpu_custom_call.1} parent=47 // pred_region
          %418 = dma.done %s411, 4096
        $region60: #{tpu_custom_call.1} parent=47 // pred_fallthru
          _
        %s419 = sand.u32 %s167, 1
        %s420 = scalar_lea.sflag [#allocation11], %s419
        %s421 = sand.u32 %s167, 1
        %s422 = scalar_lea.vmem [#allocation10], %s421
        // Predicated region
        $region61: #{tpu_custom_call.1} parent=47 // pred_check
          %p423 = pneg %p180
        $region62: #{tpu_custom_call.1} parent=47 // pred_check_branch
          %425 = sbr.rel (%p423) target = $region64
        $region63: #{tpu_custom_call.1} parent=47 // pred_region
          %426 = dma.done %s420, 16
        $region64: #{tpu_custom_call.1} parent=47 // pred_fallthru
          _
        %s427 = sand.u32 %s59, 1
        %s428 = scalar_lea.sflag [#allocation5], %s427
        %s429 = sand.u32 %s59, 1
        %s430 = smul.addr %s429, 16
        %s431 = scalar_lea.vmem [#allocation4], %s430
        %p432 = pneg %p72
        %p433 = pneg %p69
        %s434 = sand.u32 %s30, 1
        %s435 = scalar_lea.sflag [#allocation8], %s434
        %s436 = sand.u32 %s87, 1
        %s437 = smul.addr %s436, 256
        %s438 = scalar_lea.vmem [#allocation7], %s437
        %p439 = pneg %p100
        %p440 = pneg %p97
        %s441 = sand.u32 %s30, 1
        %s442 = scalar_lea.sflag [#allocation8], %s441
        %s443 = sand.u32 %s115, 1
        %s444 = smul.addr %s443, 256
        %s445 = scalar_lea.vmem [#allocation9], %s444
        %p446 = pneg %p128
        %p447 = pneg %p125
        %p448 = scmp.lt.s32.totalorder %s36, 1
        %s449 = scalar_select %p448, %s36, 1
        %s450 = scalar_lea.vmem %s3, %s449
        %p451 = pneg %p154
        %p452 = pneg %p151
        %s453 = sand.u32 %s167, 1
        %s454 = scalar_lea.sflag [#allocation11], %s453
        %s455 = sand.u32 %s167, 1
        %s456 = scalar_lea.vmem [#allocation10], %s455
        %p457 = pneg %p180
        %p458 = pneg %p177
        %s459 = smul.u32 2, %s37
        %p460 = scmp.lt.s32.totalorder %s459, 3
        %s461 = scalar_select %p460, %s459, 3
        %s462 = scalar_lea.vmem %s5, %s461
        %p463 = pneg %p206
        %p464 = pneg %p203
        %p465 = scmp.lt.s32.totalorder %s36, 1
        %s466 = scalar_select %p465, %s36, 1
        %s467 = scalar_lea.vmem %s6, %s466
        %p468 = pneg %p232
        %p469 = pneg %p229
        %p470 = pneg %p260
        %p471 = pneg %p257
        %s472 = sand.u32 %s247, 1
        %s473 = scalar_lea.sflag [#allocation6], %s472
        %s474 = sand.u32 %s247, 1
        %s475 = smul.addr %s474, 8
        %s476 = scalar_lea.vmem [#allocation12], %s475
        %s477 = smul.u32 2, %s37
        %s478 = smul.u32 16, %s36
        %s479 = smul.u32 2, %s37
        %s480 = smul.u32 16, %s36
        %s481 = smul.u32 2, %s37
        %p482 = scmp.lt.s32.totalorder %s36, 1
        %s483 = scalar_select %p482, %s36, 1
        %s484 = scalar_lea.vmem %s3, %s483
        %s485 = smul.u32 2, %s37
        %p486 = scmp.lt.s32.totalorder %s485, 3
        %s487 = scalar_select %p486, %s485, 3
        %s488 = scalar_lea.vmem %s5, %s487
        %s489 = smul.u32 2, %s37
        %p490 = scmp.lt.s32.totalorder %s36, 1
        %s491 = scalar_select %p490, %s36, 1
        %s492 = scalar_lea.vmem %s6, %s491
        %p493 = scmp.eq.s32.totalorder %s37, 0
        // Predicated region
        $region65: #{tpu_custom_call.1} parent=47 // pred_check
          %p494 = pneg %p493
        $region66: #{tpu_custom_call.1} parent=47 // pred_check_branch
          %496 = sbr.rel (%p494) target = $region68
        $region67: #{tpu_custom_call.1} parent=47 // pred_region
          %497 = vst [vmem:[#allocation2] sm:$0xff] 0.0
          %498 = vst [vmem:[#allocation3] sm:$0xff] 0.0
        $region68: #{tpu_custom_call.1} parent=47 // pred_fallthru
          _
        %v499 = vld [vmem:[%s396] sm:$0xff]
        %v500 = vld [vmem:[%s396 + $0x8] sm:$0xff]
        %v501 = vld [vmem:[%s488] sm:$0x3]
        %v503 = vlaneseq
        %v504 = vshrl.u32 %v503, 7
        %v505 = vsub.s32 0, %v504
        %v506 = vrot.slane %v501, %v505
        %v507 = vlaneseq
        %v508 = vshrl.u32 %v507, 7
        %v509 = vsub.s32 1, %v508
        %v510 = vrot.slane %v501, %v509
        %v513 = vmul.f32 %v499, %v506
        %v514 = vmul.f32 %v500, %v510
        %v515 = vld [vmem:[#allocation2] sm:$0xff]
        %v516 = vld [vmem:[%s405] sm:$0xff]
        %v517 = vld [vmem:[%s405 + $0x8] sm:$0xff]
        %v518 = vld [vmem:[%s405 + $0x10] sm:$0xff]
        %v519 = vld [vmem:[%s405 + $0x18] sm:$0xff]
        %v520 = vld [vmem:[%s405 + $0x20] sm:$0xff]
        %v521 = vld [vmem:[%s405 + $0x28] sm:$0xff]
        %v522 = vld [vmem:[%s405 + $0x30] sm:$0xff]
        %v523 = vld [vmem:[%s405 + $0x38] sm:$0xff]
        %v524 = vld [vmem:[%s405 + $0x40] sm:$0xff]
        %v525 = vld [vmem:[%s405 + $0x48] sm:$0xff]
        %v526 = vld [vmem:[%s405 + $0x50] sm:$0xff]
        %v527 = vld [vmem:[%s405 + $0x58] sm:$0xff]
        %v528 = vld [vmem:[%s405 + $0x60] sm:$0xff]
        %v529 = vld [vmem:[%s405 + $0x68] sm:$0xff]
        %v530 = vld [vmem:[%s405 + $0x70] sm:$0xff]
        %v531 = vld [vmem:[%s405 + $0x78] sm:$0xff]
        %v532 = vld [vmem:[%s405 + $0x80] sm:$0xff]
        %v533 = vld [vmem:[%s405 + $0x88] sm:$0xff]
        %v534 = vld [vmem:[%s405 + $0x90] sm:$0xff]
        %v535 = vld [vmem:[%s405 + $0x98] sm:$0xff]
        %v536 = vld [vmem:[%s405 + $0xa0] sm:$0xff]
        %v537 = vld [vmem:[%s405 + $0xa8] sm:$0xff]
        %v538 = vld [vmem:[%s405 + $0xb0] sm:$0xff]
        %v539 = vld [vmem:[%s405 + $0xb8] sm:$0xff]
        %v540 = vld [vmem:[%s405 + $0xc0] sm:$0xff]
        %v541 = vld [vmem:[%s405 + $0xc8] sm:$0xff]
        %v542 = vld [vmem:[%s405 + $0xd0] sm:$0xff]
        %v543 = vld [vmem:[%s405 + $0xd8] sm:$0xff]
        %v544 = vld [vmem:[%s405 + $0xe0] sm:$0xff]
        %v545 = vld [vmem:[%s405 + $0xe8] sm:$0xff]
        %v546 = vld [vmem:[%s405 + $0xf0] sm:$0xff]
        %v547 = vld [vmem:[%s405 + $0xf8] sm:$0xff]
        %548 = vmatprep.subr.mxu0 %v547
        %549 = vmatpush1.xpose.msra.mxu0 %v546
        %550 = vmatprep.subr.mxu0 %v545
        %551 = vmatpush1.xpose.msra.mxu0 %v544
        %552 = vmatprep.subr.mxu0 %v543
        %553 = vmatpush1.xpose.msra.mxu0 %v542
        %554 = vmatprep.subr.mxu0 %v541
        %555 = vmatpush1.xpose.msra.mxu0 %v540
        %556 = vmatprep.subr.mxu0 %v539
        %557 = vmatpush1.xpose.msra.mxu0 %v538
        %558 = vmatprep.subr.mxu0 %v537
        %559 = vmatpush1.xpose.msra.mxu0 %v536
        %560 = vmatprep.subr.mxu0 %v535
        %561 = vmatpush1.xpose.msra.mxu0 %v534
        %562 = vmatprep.subr.mxu0 %v533
        %563 = vmatpush1.xpose.msra.mxu0 %v532
        %564 = vmatprep.subr.mxu0 %v531
        %565 = vmatpush1.xpose.msra.mxu0 %v530
        %566 = vmatprep.subr.mxu0 %v529
        %567 = vmatpush1.xpose.msra.mxu0 %v528
        %568 = vmatprep.subr.mxu0 %v527
        %569 = vmatpush1.xpose.msra.mxu0 %v526
        %570 = vmatprep.subr.mxu0 %v525
        %571 = vmatpush1.xpose.msra.mxu0 %v524
        %572 = vmatprep.subr.mxu0 %v523
        %573 = vmatpush1.xpose.msra.mxu0 %v522
        %574 = vmatprep.subr.mxu0 %v521
        %575 = vmatpush1.xpose.msra.mxu0 %v520
        %576 = vmatprep.subr.mxu0 %v519
        %577 = vmatpush1.xpose.msra.mxu0 %v518
        %578 = vmatprep.subr.mxu0 %v517
        %579 = vmatpush1.xpose.msra.mxu0 %v516
        %580 = vmatprep.subr.mxu0 0.0
        %581 = vmatpush2.xpose.msra.mxu0 0.0
        %582 = vmatprep.subr.mxu0 0.0
        %583 = vmatpush2.xpose.msra.mxu0 0.0
        %584 = vmatprep.subr.mxu0 0.0
        %585 = vmatpush2.xpose.msra.mxu0 0.0
        %586 = vmatprep.subr.mxu0 0.0
        %587 = vmatpush2.xpose.msra.mxu0 0.0
        %588 = vmatprep.subr.mxu0 0.0
        %589 = vmatpush2.xpose.msra.mxu0 0.0
        %590 = vmatprep.subr.mxu0 0.0
        %591 = vmatpush2.xpose.msra.mxu0 0.0
        %592 = vmatprep.subr.mxu0 0.0
        %593 = vmatpush2.xpose.msra.mxu0 0.0
        %594 = vmatprep.subr.mxu0 0.0
        %595 = vmatpush2.xpose.msra.mxu0 0.0
        %596 = vmatprep.subr.mxu0 0.0
        %597 = vmatpush2.xpose.msra.mxu0 0.0
        %598 = vmatprep.subr.mxu0 0.0
        %599 = vmatpush2.xpose.msra.mxu0 0.0
        %600 = vmatprep.subr.mxu0 0.0
        %601 = vmatpush2.xpose.msra.mxu0 0.0
        %602 = vmatprep.subr.mxu0 0.0
        %603 = vmatpush2.xpose.msra.mxu0 0.0
        %604 = vmatprep.subr.mxu0 0.0
        %605 = vmatpush2.xpose.msra.mxu0 0.0
        %606 = vmatprep.subr.mxu0 0.0
        %607 = vmatpush2.xpose.msra.mxu0 0.0
        %608 = vmatprep.subr.mxu0 0.0
        %609 = vmatpush2.xpose.msra.mxu0 0.0
        %610 = vmatprep.subr.mxu0 0.0
        %611 = vmatpush2.xpose.msra.mxu0 0.0
        %612 = vmatprep.mubr.f32.mxu0 %v500
        %613 = vmatmul.mubr.f32.gmra.mxu0 %v499
        %v614 = vpop.f32.mrf.mxu0
        %v615 = vadd.f32 0.0, %v614
        %v616 = vpop.f32.mrf.mxu0
        %617 = vdwg.mxu0
        %v618 = vadd.f32 %v515, %v615
        %619 = vst [vmem:[#allocation2] sm:$0xff] %v618
        %v620 = vld [vmem:[#allocation3] sm:$0xff]
        %v621 = vld [vmem:[%s414] sm:$0xff]
        %v622 = vld [vmem:[%s414 + $0x8] sm:$0xff]
        %v623 = vld [vmem:[%s414 + $0x10] sm:$0xff]
        %v624 = vld [vmem:[%s414 + $0x18] sm:$0xff]
        %v625 = vld [vmem:[%s414 + $0x20] sm:$0xff]
        %v626 = vld [vmem:[%s414 + $0x28] sm:$0xff]
        %v627 = vld [vmem:[%s414 + $0x30] sm:$0xff]
        %v628 = vld [vmem:[%s414 + $0x38] sm:$0xff]
        %v629 = vld [vmem:[%s414 + $0x40] sm:$0xff]
        %v630 = vld [vmem:[%s414 + $0x48] sm:$0xff]
        %v631 = vld [vmem:[%s414 + $0x50] sm:$0xff]
        %v632 = vld [vmem:[%s414 + $0x58] sm:$0xff]
        %v633 = vld [vmem:[%s414 + $0x60] sm:$0xff]
        %v634 = vld [vmem:[%s414 + $0x68] sm:$0xff]
        %v635 = vld [vmem:[%s414 + $0x70] sm:$0xff]
        %v636 = vld [vmem:[%s414 + $0x78] sm:$0xff]
        %v637 = vld [vmem:[%s414 + $0x80] sm:$0xff]
        %v638 = vld [vmem:[%s414 + $0x88] sm:$0xff]
        %v639 = vld [vmem:[%s414 + $0x90] sm:$0xff]
        %v640 = vld [vmem:[%s414 + $0x98] sm:$0xff]
        %v641 = vld [vmem:[%s414 + $0xa0] sm:$0xff]
        %v642 = vld [vmem:[%s414 + $0xa8] sm:$0xff]
        %v643 = vld [vmem:[%s414 + $0xb0] sm:$0xff]
        %v644 = vld [vmem:[%s414 + $0xb8] sm:$0xff]
        %v645 = vld [vmem:[%s414 + $0xc0] sm:$0xff]
        %v646 = vld [vmem:[%s414 + $0xc8] sm:$0xff]
        %v647 = vld [vmem:[%s414 + $0xd0] sm:$0xff]
        %v648 = vld [vmem:[%s414 + $0xd8] sm:$0xff]
        %v649 = vld [vmem:[%s414 + $0xe0] sm:$0xff]
        %v650 = vld [vmem:[%s414 + $0xe8] sm:$0xff]
        %v651 = vld [vmem:[%s414 + $0xf0] sm:$0xff]
        %v652 = vld [vmem:[%s414 + $0xf8] sm:$0xff]
        %653 = vmatprep.subr.mxu0 %v652
        %654 = vmatpush1.xpose.msra.mxu0 %v651
        %655 = vmatprep.subr.mxu0 %v650
        %656 = vmatpush1.xpose.msra.mxu0 %v649
        %657 = vmatprep.subr.mxu0 %v648
        %658 = vmatpush1.xpose.msra.mxu0 %v647
        %659 = vmatprep.subr.mxu0 %v646
        %660 = vmatpush1.xpose.msra.mxu0 %v645
        %661 = vmatprep.subr.mxu0 %v644
        %662 = vmatpush1.xpose.msra.mxu0 %v643
        %663 = vmatprep.subr.mxu0 %v642
        %664 = vmatpush1.xpose.msra.mxu0 %v641
        %665 = vmatprep.subr.mxu0 %v640
        %666 = vmatpush1.xpose.msra.mxu0 %v639
        %667 = vmatprep.subr.mxu0 %v638
        %668 = vmatpush1.xpose.msra.mxu0 %v637
        %669 = vmatprep.subr.mxu0 %v636
        %670 = vmatpush1.xpose.msra.mxu0 %v635
        %671 = vmatprep.subr.mxu0 %v634
        %672 = vmatpush1.xpose.msra.mxu0 %v633
        %673 = vmatprep.subr.mxu0 %v632
        %674 = vmatpush1.xpose.msra.mxu0 %v631
        %675 = vmatprep.subr.mxu0 %v630
        %676 = vmatpush1.xpose.msra.mxu0 %v629
        %677 = vmatprep.subr.mxu0 %v628
        %678 = vmatpush1.xpose.msra.mxu0 %v627
        %679 = vmatprep.subr.mxu0 %v626
        %680 = vmatpush1.xpose.msra.mxu0 %v625
        %681 = vmatprep.subr.mxu0 %v624
        %682 = vmatpush1.xpose.msra.mxu0 %v623
        %683 = vmatprep.subr.mxu0 %v622
        %684 = vmatpush1.xpose.msra.mxu0 %v621
        %685 = vmatprep.subr.mxu0 0.0
        %686 = vmatpush2.xpose.msra.mxu0 0.0
        %687 = vmatprep.subr.mxu0 0.0
        %688 = vmatpush2.xpose.msra.mxu0 0.0
        %689 = vmatprep.subr.mxu0 0.0
        %690 = vmatpush2.xpose.msra.mxu0 0.0
        %691 = vmatprep.subr.mxu0 0.0
        %692 = vmatpush2.xpose.msra.mxu0 0.0
        %693 = vmatprep.subr.mxu0 0.0
        %694 = vmatpush2.xpose.msra.mxu0 0.0
        %695 = vmatprep.subr.mxu0 0.0
        %696 = vmatpush2.xpose.msra.mxu0 0.0
        %697 = vmatprep.subr.mxu0 0.0
        %698 = vmatpush2.xpose.msra.mxu0 0.0
        %699 = vmatprep.subr.mxu0 0.0
        %700 = vmatpush2.xpose.msra.mxu0 0.0
        %701 = vmatprep.subr.mxu0 0.0
        %702 = vmatpush2.xpose.msra.mxu0 0.0
        %703 = vmatprep.subr.mxu0 0.0
        %704 = vmatpush2.xpose.msra.mxu0 0.0
        %705 = vmatprep.subr.mxu0 0.0
        %706 = vmatpush2.xpose.msra.mxu0 0.0
        %707 = vmatprep.subr.mxu0 0.0
        %708 = vmatpush2.xpose.msra.mxu0 0.0
        %709 = vmatprep.subr.mxu0 0.0
        %710 = vmatpush2.xpose.msra.mxu0 0.0
        %711 = vmatprep.subr.mxu0 0.0
        %712 = vmatpush2.xpose.msra.mxu0 0.0
        %713 = vmatprep.subr.mxu0 0.0
        %714 = vmatpush2.xpose.msra.mxu0 0.0
        %715 = vmatprep.subr.mxu0 0.0
        %716 = vmatpush2.xpose.msra.mxu0 0.0
        %717 = vmatprep.mubr.f32.mxu0 %v514
        %718 = vmatmul.mubr.f32.gmra.mxu0 %v513
        %v719 = vpop.f32.mrf.mxu0
        %v720 = vadd.f32 0.0, %v719
        %v721 = vpop.f32.mrf.mxu0
        %722 = vdwg.mxu0
        %v723 = vadd.f32 %v620, %v720
        %724 = vst [vmem:[#allocation3] sm:$0xff] %v723
        %p725 = scmp.eq.s32.totalorder %s37, 1
        // Predicated region
        $region69: #{tpu_custom_call.1} parent=47 // pred_check
          %p726 = pneg %p725
        $region70: #{tpu_custom_call.1} parent=47 // pred_check_branch
          %728 = sbr.rel (%p726) target = $region72
        $region71: #{tpu_custom_call.1} parent=47 // pred_region
          %v729 = vld [vmem:[%s492] sm:$0x1]
          %v730 = vld [vmem:[%s484] sm:$0x1]
          %v731 = vld [vmem:[%s422] sm:$0x1]
          %v732 = vmul.f32 %v731, %v729
          %v733 = vadd.f32 %v730, %v732
          %v734 = vld [vmem:[#allocation2] sm:$0xff]
          %v735 = vld [vmem:[#allocation3] sm:$0xff]
          %v737 = vlaneseq
          %v738 = vshrl.u32 %v737, 7
          %v739 = vsub.s32 0, %v738
          %v740 = vrot.slane %v729, %v739
          %v742 = vmul.f32 %v735, %v740
          %v743 = vadd.f32 %v734, %v742
          %v745 = vlaneseq
          %v746 = vshrl.u32 %v745, 7
          %v747 = vsub.s32 0, %v746
          %v748 = vrot.slane %v733, %v747
          %v750 = vadd.f32 %v743, %v748
          %751 = vst [vmem:[%s476] sm:$0xff] %v750
        $region72: #{tpu_custom_call.1} parent=47 // pred_fallthru
          _
        %s752 = sand.u32 %s247, 1
        %s753 = scalar_lea.sflag [#allocation6], %s752
        %s754 = sand.u32 %s247, 1
        %s755 = smul.addr %s754, 8
        %s756 = scalar_lea.vmem [#allocation12], %s755
        // Predicated region
        $region73: #{tpu_custom_call.1} parent=47 // pred_check
          %p757 = pneg %p257
        $region74: #{tpu_custom_call.1} parent=47 // pred_check_branch
          %759 = sbr.rel (%p757) target = $region76
        $region75: #{tpu_custom_call.1} parent=47 // pred_region
          %s761 = ssub.s32 128, 128
          %762 = vsyncadd %s753, %s761
          %s763 = smul.addr %s35, 2
          %s764 = sadd.s32 %s36, %s763
          %s765 = smul.addr %s764, 128
          %s766 = scalar_lea.hbm %s7, %s765
          %s768 = sshll.u32 %s756, 4
          %s769 = int_to_ptr.vmem [resolvable:$true] %s768
          %771 = dma.vmem_to_hbm [thread:$0]  %s769, 128, %s766, %s753
        $region76: #{tpu_custom_call.1} parent=47 // pred_fallthru
          _
      $region48: #{tpu_custom_call.1} parent=5 // pred_fallthru
        _
      %p772 = scmp.le.s32.totalorder 2, %s25
      // Predicated region
      $region77: #{tpu_custom_call.1} parent=5 // pred_check
        %p773 = pneg %p772
      $region78: #{tpu_custom_call.1} parent=5 // pred_check_branch
        %775 = sbr.rel (%p773) target = $region80
      $region79: #{tpu_custom_call.1} parent=5 // pred_region
        %s776 = ssub.s32 %s25, 2
        // Predicated region
        $region81: #{tpu_custom_call.1} parent=79 // pred_check
          %p777 = pneg %p263
        $region82: #{tpu_custom_call.1} parent=79 // pred_check_branch
          %779 = sbr.rel (%p777) target = $region84
        $region83: #{tpu_custom_call.1} parent=79 // pred_region
          %s780 = sand.u32 %s248, 1
          %s781 = scalar_lea.sflag [#allocation6], %s780
          %s782 = sand.u32 %s248, 1
          %s783 = smul.addr %s782, 8
          %s784 = scalar_lea.vmem [#allocation12], %s783
          %785 = dma.done %s781, 128
        $region84: #{tpu_custom_call.1} parent=79 // pred_fallthru
          _
      $region80: #{tpu_custom_call.1} parent=5 // pred_fallthru
        _
    $region6: #{tpu_custom_call.1} parent=1 // loop_footer
      %s29 = sadd.s32 1, %s25
    $region7: #{tpu_custom_call.1} parent=1 // loop_footer_branch
      %24 = sbr.rel target = $region3
    $region8: #{tpu_custom_call.1} parent=1 // loop_exit
      _
    %786 = vsyncpa [#allocation5], 1
    %s787 = scalar_lea.sflag [#allocation5], 1
    %788 = vsyncpa %s787, 1
    %789 = vsyncpa [#allocation8], 1
    %s790 = scalar_lea.sflag [#allocation8], 1
    %791 = vsyncpa %s790, 1
    %792 = vsyncpa [#allocation11], 1
    %s793 = scalar_lea.sflag [#allocation11], 1
    %794 = vsyncpa %s793, 1
    %795 = vsyncpa [#allocation6], 1
    %s796 = scalar_lea.sflag [#allocation6], 1
    %797 = vsyncpa %s796, 1

</llo_original>
